<compile_context>
chip_gen: v6e
topology: v6e:2x2x1
jax: 0.10.0
libtpu: 0.0.40
codegen_flags: <defaults>
</compile_context>

<pallas_src>
import functools
import math

import jax
import jax.numpy as jnp
from jax.experimental import pallas as pl
from jax.experimental.pallas import tpu as pltpu


def _round_up(x, m):
    return ((x + m - 1) // m) * m


def _lane_repeat(v, reps):
    """Repeat `v` along its last (lane) axis `reps` times via log2-doubling concats."""
    out = None
    piece = v
    r = int(reps)
    while r > 0:
        if r & 1:
            out = piece if out is None else jnp.concatenate([out, piece], axis=-1)
        r >>= 1
        if r:
            piece = jnp.concatenate([piece, piece], axis=-1)
    return out


def _pos_enc_kernel(x_ref, pe_ref, o_ref, *, reps):
    """x_ref / o_ref: (ts, B*D) lane-dense tiles; pe_ref: thin (ts, D) f32 slab."""
    pe = pe_ref[...]                                   # (ts, D) or (ts, B*D), f32
    if reps > 1:
        pe = _lane_repeat(pe, reps)                    # aligned lane concat -> (ts, B*D)
    # Add in f32 (matching the f32 PE buffer) and round once into the output dtype.
    o_ref[...] = (x_ref[...].astype(jnp.float32) + pe).astype(o_ref.dtype)


def _build_pe(seq_len, d_model):
    """(seq_len, d_model) f32 sin/cos table, built exactly like the PyTorch buffer."""
    position = jnp.arange(seq_len, dtype=jnp.float32)[:, None]
    div_term = jnp.exp(jnp.arange(0, d_model, 2, dtype=jnp.float32)
                       * (-math.log(10000.0) / d_model))
    pe = jnp.zeros((seq_len, d_model), jnp.float32)
    pe = pe.at[:, 0::2].set(jnp.sin(position * div_term))
    pe = pe.at[:, 1::2].set(jnp.cos(position * div_term))
    return pe


def _choose_ts(S, B, D, itemsize, pe_lanes,
               target_tile_bytes=6 << 20, vmem_budget=38 << 20):
    """Sequence-tile size: ~6 MiB lane-dense x-tiles, padded-footprint aware."""
    bd_pad = _round_up(B * D, 128)
    pe_pad = _round_up(pe_lanes, 128)
    # Padded VMEM bytes per sequence row: double-buffered {x-in, out, f32 pe}.
    row_vmem = 2 * (2 * bd_pad * itemsize + pe_pad * 4)

    ts = max(8, int(target_tile_bytes) // max(1, bd_pad * itemsize))
    ts -= ts % 8
    while ts > 8 and ts * row_vmem > vmem_budget:
        half = ts // 2
        ts = max(8, half - half % 8)
    if ts >= S:
        return S

    # Large inputs: keep >=4 grid steps so the DMA pipeline amortizes its
    # prologue/epilogue, and prefer an even step count so the v7x megacore
    # split over the "parallel" axis isn't lopsided.
    if S * bd_pad * itemsize >= (8 << 20):
        while ts > 8 and pl.cdiv(S, ts) < 4:
            half = ts // 2
            ts = max(8, half - half % 8)
        steps = pl.cdiv(S, ts)
        if steps > 1 and steps % 2 == 1:
            cand = _round_up(pl.cdiv(S, steps + 1), 8)
            if 8 <= cand < S and pl.cdiv(S, cand) % 2 == 0:
                ts = cand
    return min(ts, S)


def positional_encoding(x, *, max_len=5000, ts=None, pe=None, donate_x=False):
    """x: (S, B, D) array. Returns x + pe[:S], PE broadcast over the batch dim."""
    S, B, D = x.shape
    assert S <= max_len, "sequence length exceeds max_len"
    assert D % 2 == 0, "d_model must be even (as in the PyTorch module)"

    # PE table (f32), built exactly like the PyTorch buffer (or user-supplied).
    if pe is None:
        pe_tbl = _build_pe(S, D)                                # (S, D) f32
    else:
        pe_tbl = jnp.reshape(pe, (pe.shape[0], D))[:S].astype(jnp.float32)

    # Replication strategy across the flattened batch groups:
    #   * D lane-aligned: stream the thin (ts, D) slab, lane-concat B times in-kernel.
    #   * otherwise (small / unaligned D): pre-replicate in the wrapper (tiny shapes).
    if B == 1 or D % 128 == 0:
        pe_in, pe_lanes, reps = pe_tbl, D, B
    else:
        pe_in, pe_lanes, reps = jnp.tile(pe_tbl, (1, B)), B * D, 1

    itemsize = jnp.dtype(x.dtype).itemsize
    if ts is None:
        ts = _choose_ts(S, B, D, itemsize, pe_lanes)
    ts = min(int(ts), S)
    assert ts == S or ts % 8 == 0, "ts must be a multiple of 8 (or equal to S)"
    grid = (pl.cdiv(S, ts),)

    BD = B * D
    x2 = x.reshape(S, BD)                                        # free, contiguous

    # VMEM limit from *padded* tiles: sublanes round to 8, lanes to 128; each of
    # {x-in, out, pe} is double-buffered by the pipeline.
    ts_pad = _round_up(ts, 8)
    tile_vmem = 2 * (2 * ts_pad * _round_up(BD, 128) * itemsize
                     + ts_pad * _round_up(pe_lanes, 128) * 4)
    vmem_limit = int(min(max(tile_vmem + (2 << 20), 16 << 20), 48 << 20))

    kernel = functools.partial(_pos_enc_kernel, reps=reps)
    out2 = pl.pallas_call(
        kernel,
        out_shape=jax.ShapeDtypeStruct((S, BD), x.dtype),
        grid_spec=pltpu.PrefetchScalarGridSpec(
            num_scalar_prefetch=0,
            grid=grid,
            in_specs=[pl.BlockSpec((ts, BD), lambda i: (i, 0)),
                      pl.BlockSpec((ts, pe_lanes), lambda i: (i, 0))],
            out_specs=pl.BlockSpec((ts, BD), lambda i: (i, 0)),
        ),
        compiler_params=pltpu.CompilerParams(
            dimension_semantics=("parallel",),
            vmem_limit_bytes=vmem_limit,
        ),
        input_output_aliases=({0: 0} if donate_x else {}),
    )(x2, pe_in)
    return out2.reshape(S, B, D)


def _reference(x, max_len=5000):
    # Pure-JAX replica of the PyTorch buffer construction + forward.
    S, B, D = x.shape
    position = jnp.arange(max_len, dtype=jnp.float32)[:, None]              # (max_len, 1)
    div_term = jnp.exp(jnp.arange(0, D, 2, dtype=jnp.float32)
                       * (-math.log(10000.0) / D))                          # (D//2,)
    pe = jnp.zeros((max_len, D), jnp.float32)
    pe = pe.at[:, 0::2].set(jnp.sin(position * div_term))
    pe = pe.at[:, 1::2].set(jnp.cos(position * div_term))
    pe = pe[:, None, :]                                                     # (max_len, 1, D)
    return x + pe[:S, :]


if __name__ == "__main__":
    key = jax.random.PRNGKey(0)

    # Small shape matching the module convention: (seq=8, batch=2, d_model=32).
    S, B, D = 8, 2, 32
    x = jax.random.normal(key, (S, B, D), dtype=jnp.float32)
    out = jax.block_until_ready(positional_encoding(x, max_len=5000))
    ref = _reference(x)
    assert out.shape == x.shape and out.dtype == x.dtype
    assert jnp.allclose(out, ref, atol=1e-5, rtol=1e-5), "mismatch vs reference (small)"

    # Multi-step grid with a ragged last tile, lane-aligned D=128 and in-kernel
    # PE lane-replication, to exercise the tiled / pipelined path.
    S2, B2, D2 = 200, 4, 128
    x2 = jax.random.normal(jax.random.fold_in(key, 1), (S2, B2, D2), dtype=jnp.float32)
    out2 = jax.block_until_ready(positional_encoding(x2, ts=48))
    ref2 = _reference(x2)
    assert jnp.allclose(out2, ref2, atol=1e-5, rtol=1e-5), "mismatch vs reference (tiled)"

    # bf16 input path: f32 add in-kernel, single rounding into the bf16 output.
    S3, B3, D3 = 64, 2, 128
    x3 = jax.random.normal(jax.random.fold_in(key, 2), (S3, B3, D3), dtype=jnp.bfloat16)
    out3 = jax.block_until_ready(positional_encoding(x3))
    ref3 = _reference(x3.astype(jnp.float32))
    assert out3.dtype == jnp.bfloat16
    assert jnp.allclose(out3.astype(jnp.float32), ref3, atol=5e-2, rtol=5e-2), \
        "mismatch vs reference (bf16)"

    print("KERNEL_OK")
</pallas_src>

<mosaic_0001>
module attributes {stable_mosaic.version = 11 : i64} {
  func.func @_pos_enc_kernel(%arg0: i32, %arg1: memref<8x64xf32, #tpu.memory_space<vmem>>, %arg2: memref<8x64xf32, #tpu.memory_space<vmem>>, %arg3: memref<8x64xf32, #tpu.memory_space<vmem>>) attributes {dimension_semantics = [#tpu.dimension_semantics<parallel>], iteration_bounds = array<i64: 1>, scalar_prefetch = 0 : i64, scratch_operands = 0 : i64, tpu.core_type = #tpu.core_type<tc>, window_params = [{transform_indices = @transform_0, window_bounds = array<i64: 8, 64>}, {transform_indices = @transform_1, window_bounds = array<i64: 8, 64>}, {transform_indices = @transform_2, window_bounds = array<i64: 8, 64>}]} {
    %c0 = arith.constant 0 : index
    %c0_0 = arith.constant 0 : index
    %0 = vector.load %arg2[%c0, %c0_0] : memref<8x64xf32, #tpu.memory_space<vmem>>, vector<8x64xf32>
    %c0_1 = arith.constant 0 : index
    %c0_2 = arith.constant 0 : index
    %1 = vector.load %arg1[%c0_1, %c0_2] : memref<8x64xf32, #tpu.memory_space<vmem>>, vector<8x64xf32>
    %2 = arith.addf %1, %0 : vector<8x64xf32>
    %c0_3 = arith.constant 0 : index
    %c0_4 = arith.constant 0 : index
    %3 = vector.load %arg3[%c0_3, %c0_4] : memref<8x64xf32, #tpu.memory_space<vmem>>, vector<8x64xf32>
    tpu.vector_store %arg3[%c0_3, %c0_4], %2 {strides = array<i32>} : memref<8x64xf32, #tpu.memory_space<vmem>>, vector<8x64xf32>,
    return
  }
  func.func @transform_0(%arg0: i32) -> (i32, i32) {
    %c0_i32 = arith.constant 0 : i32
    %c0_i32_0 = arith.constant 0 : i32
    return %arg0, %c0_i32 : i32, i32
  }
  func.func @transform_1(%arg0: i32) -> (i32, i32) {
    %c0_i32 = arith.constant 0 : i32
    %c0_i32_0 = arith.constant 0 : i32
    return %arg0, %c0_i32 : i32, i32
  }
  func.func @transform_2(%arg0: i32) -> (i32, i32) {
    %c0_i32 = arith.constant 0 : i32
    %c0_i32_0 = arith.constant 0 : i32
    return %arg0, %c0_i32 : i32, i32
  }
}

</mosaic_0001>

<llo_original>
// kernel: tpu_custom_call.1
$region0: #{tpu_custom_call.1}
  #allocation0 [shape = 'u32[]', space=smem, size = 0x4, offset = 0x4, fixed_abs, tag = 'smem constant byte address 0x4 - core index']
  #allocation1 [shape = 'u32[144,128]{1,0:T(1,128)}', space=vmem, size = 0x12000, scoped, tag = 'internal scratch']
  %s0 = inlined_call_operand.hbm [shape: f32[8,64], index: 0, kind: input, shape index: {}]
  %s1 = inlined_call_operand.hbm [shape: f32[8,64], index: 1, kind: input, shape index: {}]
  %s2 = inlined_call_operand.hbm [shape: f32[8,64], index: 2, kind: output, shape index: {}]
  %s3 = sld [smem:[#allocation0]]
  $region26: #{tpu_custom_call.1} parent=0
    _
  %s5 = ssub.s32 1, %s3
  %s6 = scalar_select 0, %s5, %s3
  $region1: #{tpu_custom_call.1} parent=0
    #allocation2 [shape = 'u8[4096]{0}', space=vmem, size = 0x1000, scoped, tag = 'input window, operand 0, single buffered']
    #allocation3 [shape = 's32[1]{0}', space=sflag, size = 0x4, scoped, tag = 'scoped memory for tpu_custom_call.1']
    #allocation4 [shape = 's32[1]{0}', space=sflag, size = 0x4, scoped, tag = 'scoped memory for tpu_custom_call.1']
    #allocation5 [shape = 'u8[4096]{0}', space=vmem, size = 0x1000, scoped, tag = 'input window, operand 1, single buffered']
    #allocation6 [shape = 's32[1]{0}', space=sflag, size = 0x4, scoped, tag = 'scoped memory for tpu_custom_call.1']
    #allocation7 [shape = 'u8[4096]{0}', space=vmem, size = 0x1000, scoped, tag = 'output window, operand 0, single buffered']
    %7 = vsyncpa [#allocation3], 0
    %8 = vsyncpa [#allocation6], 0
    %9 = vsyncpa [#allocation4], 0
    // Predicated region
    $region2: #{tpu_custom_call.1} parent=1 // pred_check
      _
    $region3: #{tpu_custom_call.1} parent=1 // pred_check_branch
      %11 = sbr.rel (0) target = $region5
    $region4: #{tpu_custom_call.1} parent=1 // pred_region
      %s13 = ssub.s32 128, 128
      %14 = vsyncadd [#allocation3], %s13
      %s16 = sshll.u32 [#allocation2], 4
      %s17 = int_to_ptr.vmem [resolvable:$true] %s16
      %19 = dma.hbm_to_vmem [thread:$0]  %s0, 128, %s17, [#allocation3]
    $region5: #{tpu_custom_call.1} parent=1 // pred_fallthru
      _
    // Predicated region
    $region6: #{tpu_custom_call.1} parent=1 // pred_check
      _
    $region7: #{tpu_custom_call.1} parent=1 // pred_check_branch
      %21 = sbr.rel (0) target = $region9
    $region8: #{tpu_custom_call.1} parent=1 // pred_region
      %s23 = ssub.s32 128, 128
      %24 = vsyncadd [#allocation6], %s23
      %s26 = sshll.u32 [#allocation5], 4
      %s27 = int_to_ptr.vmem [resolvable:$true] %s26
      %29 = dma.hbm_to_vmem [thread:$0]  %s1, 128, %s27, [#allocation6]
    $region9: #{tpu_custom_call.1} parent=1 // pred_fallthru
      _
    // Predicated region
    $region10: #{tpu_custom_call.1} parent=1 // pred_check
      _
    $region11: #{tpu_custom_call.1} parent=1 // pred_check_branch
      %31 = sbr.rel (0) target = $region13
    $region12: #{tpu_custom_call.1} parent=1 // pred_region
      %32 = dma.done [#allocation3], 128
    $region13: #{tpu_custom_call.1} parent=1 // pred_fallthru
      _
    // Predicated region
    $region14: #{tpu_custom_call.1} parent=1 // pred_check
      _
    $region15: #{tpu_custom_call.1} parent=1 // pred_check_branch
      %34 = sbr.rel (0) target = $region17
    $region16: #{tpu_custom_call.1} parent=1 // pred_region
      %35 = dma.done [#allocation6], 128
    $region17: #{tpu_custom_call.1} parent=1 // pred_fallthru
      _
    %v36 = vld [vmem:[#allocation5] sm:$0xff]
    %v37 = vld [vmem:[#allocation2] sm:$0xff]
    %v38 = vadd.f32 %v37, %v36
    %vm39 = vcmask 523264
    %40 = vst.msk [vmem:[#allocation7] sm:$0xff] %vm39, %v38
    // Predicated region
    $region18: #{tpu_custom_call.1} parent=1 // pred_check
      _
    $region19: #{tpu_custom_call.1} parent=1 // pred_check_branch
      %42 = sbr.rel (0) target = $region21
    $region20: #{tpu_custom_call.1} parent=1 // pred_region
      %s44 = ssub.s32 128, 128
      %45 = vsyncadd [#allocation4], %s44
      %s47 = sshll.u32 [#allocation7], 4
      %s48 = int_to_ptr.vmem [resolvable:$true] %s47
      %50 = dma.vmem_to_hbm [thread:$0]  %s48, 128, %s2, [#allocation4]
    $region21: #{tpu_custom_call.1} parent=1 // pred_fallthru
      _
    // Predicated region
    $region22: #{tpu_custom_call.1} parent=1 // pred_check
      _
    $region23: #{tpu_custom_call.1} parent=1 // pred_check_branch
      %52 = sbr.rel (0) target = $region25
    $region24: #{tpu_custom_call.1} parent=1 // pred_region
      %53 = dma.done [#allocation4], 128
    $region25: #{tpu_custom_call.1} parent=1 // pred_fallthru
      _
    %54 = vsyncpa [#allocation3], 1
    %55 = vsyncpa [#allocation6], 1
    %56 = vsyncpa [#allocation4], 1

</llo_original>
